<compile_context>
chip_gen: v5e
topology: v5e:2x2
jax: 0.10.0
libtpu: 0.0.40
codegen_flags: <defaults>
</compile_context>

<pallas_src>
import jax
import jax.numpy as jnp
from jax.experimental import pallas as pl
from jax.experimental.pallas import tpu as pltpu

_INV_SQRT2 = 0.7071067811865476


# ----------------------------- GELU helpers ---------------------------------

def _erf_rational(x, *, in_kernel):
    # XLA's float32 erf rational approximation (accurate to a few ulps) using only
    # elementwise mul/add plus one reciprocal, so no special-function lowering is
    # required inside the kernel.
    alpha = (0.00022905065861350646, 0.0034082910107109506,
             0.050955695062380861, 0.18520832239976145, 1.128379143519084)
    beta = (-1.1791602954361697e-7, 0.000023547966471313185,
            0.0010179625278914885, 0.014070470171167667,
            0.11098505178285362, 0.49746925110067538, 1.0)
    x = jnp.clip(x, -3.832506856900711, 3.832506856900711)
    x2 = x * x
    p = alpha[0]
    for c in alpha[1:]:
        p = p * x2 + c
    q = beta[0]
    for c in beta[1:]:
        q = q * x2 + c
    num = x * p
    if in_kernel:
        # Push the divide to the EUP slot (idle in the epilogue) instead of the VPU.
        return num * pl.reciprocal(q, approx=False)
    return num / q


def _gelu_exact(g, *, in_kernel=False):
    # torch.nn.functional.gelu (default, exact): 0.5 * g * (1 + erf(g / sqrt(2)))
    return 0.5 * g * (1.0 + _erf_rational(g * _INV_SQRT2, in_kernel=in_kernel))


# ------------------------------ Pallas kernels --------------------------------

def _geglu_kernel_single(x_ref, w_ref, b_ref, o_ref):
    # Whole K reduction in one grid step: no VMEM accumulators needed.
    x = x_ref[...]                                             # (tm, tk) bf16
    av = jnp.dot(x, w_ref[0], preferred_element_type=jnp.float32)
    ag = jnp.dot(x, w_ref[1], preferred_element_type=jnp.float32)
    a = av + b_ref[0]                                          # (tm, tn) f32
    g = ag + b_ref[1]
    o_ref[...] = (a * _gelu_exact(g, in_kernel=True)).astype(o_ref.dtype)


def _geglu_kernel_multi(x_ref, w_ref, b_ref, o_ref, accv_ref, accg_ref):
    k = pl.program_id(2)

    @pl.when(k == 0)
    def _():
        accv_ref[...] = jnp.zeros_like(accv_ref)
        accg_ref[...] = jnp.zeros_like(accg_ref)

    x = x_ref[...]                                             # shared by both matmuls
    accv_ref[...] += jnp.dot(x, w_ref[0], preferred_element_type=jnp.float32)
    accg_ref[...] += jnp.dot(x, w_ref[1], preferred_element_type=jnp.float32)

    @pl.when(k == pl.num_programs(2) - 1)
    def _():
        a = accv_ref[...] + b_ref[0]
        g = accg_ref[...] + b_ref[1]
        o_ref[...] = (a * _gelu_exact(g, in_kernel=True)).astype(o_ref.dtype)


# ------------------------------ JAX wrapper -----------------------------------

def _round_up(x, m):
    return (x + m - 1) // m * m


def _pick_divisor_tile(padded, prefs):
    for t in prefs:
        if padded % t == 0:
            return t
    return padded


class GEGLUPallas:
    """Pallas GEGLU: value, gate = Linear(dim_in, 2*dim_out)(x).chunk(2); value * gelu(gate)."""

    def __init__(self, dim_in, dim_out, key=None, *,
                 compute_dtype=jnp.bfloat16, tm=512, tk_cap=2048):
        self.dim_in = dim_in
        self.dim_out = dim_out
        self.compute_dtype = compute_dtype
        self.tm_pref = tm

        key = jax.random.PRNGKey(0) if key is None else key
        kw, kb = jax.random.split(key)
        # PyTorch nn.Linear stores weight as (out, in); keep the transposed (in, out)
        # matrix and split into value/gate halves (first half -> value, second -> gate,
        # matching .chunk(2, dim=-1)).
        bound = 1.0 / (dim_in ** 0.5)
        w = jax.random.uniform(kw, (dim_in, 2 * dim_out), jnp.float32, -bound, bound)
        b = jax.random.uniform(kb, (2 * dim_out,), jnp.float32, -bound, bound)
        self.wx, self.wg = w[:, :dim_out], w[:, dim_out:]
        self.bx, self.bg = b[:dim_out], b[dim_out:]

        # ---- one-time padding / layout / bf16 cast of the parameters ----------
        Kp = _round_up(dim_in, 128)
        Np = _round_up(dim_out, 128)
        self.Kp, self.Np = Kp, Np
        self.tn = _pick_divisor_tile(Np, (512, 384, 256, 128))
        # Single K step whenever padded K is modest -> no accumulators in the kernel.
        self.tk = Kp if Kp <= tk_cap else _pick_divisor_tile(Kp, (1024, 512, 256, 128))

        wx_p = jnp.pad(self.wx, ((0, Kp - dim_in), (0, Np - dim_out)))
        wg_p = jnp.pad(self.wg, ((0, Kp - dim_in), (0, Np - dim_out)))
        # Stack value/gate into one operand so each k-step needs one weight DMA.
        self.w_packed = jnp.stack([wx_p, wg_p], axis=0).astype(compute_dtype)   # (2, Kp, Np)
        bx_p = jnp.pad(self.bx, (0, Np - dim_out))
        bg_p = jnp.pad(self.bg, (0, Np - dim_out))
        self.b_packed = jnp.stack([bx_p, bg_p], axis=0).reshape(2, 1, Np).astype(jnp.float32)

    # -- forward ---------------------------------------------------------------

    def __call__(self, x):
        lead = x.shape[:-1]
        out = self._forward_2d(x.reshape(-1, self.dim_in))
        return out.reshape(*lead, self.dim_out)

    def _forward_2d(self, x2d):
        R, K = x2d.shape
        out_dtype = x2d.dtype
        Kp, Np, tn, tk = self.Kp, self.Np, self.tn, self.tk

        tm = self.tm_pref if R >= self.tm_pref else _round_up(R, 8)
        Rp = _round_up(R, tm)

        xp = x2d
        if (Rp, Kp) != (R, K):
            xp = jnp.pad(xp, ((0, Rp - R), (0, Kp - K)))
        xp = xp.astype(self.compute_dtype)

        grid = (Rp // tm, Np // tn, Kp // tk)
        n_k = grid[2]

        in_specs = [
            pl.BlockSpec((tm, tk), lambda i, j, k: (i, k)),        # activations
            pl.BlockSpec((2, tk, tn), lambda i, j, k: (0, k, j)),  # value+gate weights
            pl.BlockSpec((2, 1, tn), lambda i, j, k: (0, 0, j)),   # value+gate biases
        ]
        out_spec = pl.BlockSpec((tm, tn), lambda i, j, k: (i, j))

        if n_k == 1:
            kernel = _geglu_kernel_single
            scratch = []
        else:
            kernel = _geglu_kernel_multi
            scratch = [pltpu.VMEM((tm, tn), jnp.float32),    # value accumulator
                       pltpu.VMEM((tm, tn), jnp.float32)]    # gate accumulator

        out = pl.pallas_call(
            kernel,
            out_shape=jax.ShapeDtypeStruct((Rp, Np), out_dtype),
            grid_spec=pltpu.PrefetchScalarGridSpec(
                num_scalar_prefetch=0,
                grid=grid,
                in_specs=in_specs,
                out_specs=out_spec,
                scratch_shapes=scratch),
            compiler_params=pltpu.CompilerParams(
                dimension_semantics=("parallel", "parallel", "arbitrary"),
                vmem_limit_bytes=48 * 1024 * 1024),
        )(xp, self.w_packed, self.b_packed)

        if (Rp, Np) != (R, self.dim_out):
            out = out[:R, :self.dim_out]
        return out


# ---------------------------- pure-JAX reference ------------------------------

def reference_forward(mod, x2d):
    # Matches the kernel's numerics: bf16 operands into the MXU, f32 accumulation,
    # f32 bias + exact GELU epilogue.
    xb = x2d.astype(mod.compute_dtype)
    a = jnp.dot(xb, mod.wx.astype(mod.compute_dtype),
                preferred_element_type=jnp.float32) + mod.bx
    g = jnp.dot(xb, mod.wg.astype(mod.compute_dtype),
                preferred_element_type=jnp.float32) + mod.bg
    return (a * _gelu_exact(g, in_kernel=False)).astype(x2d.dtype)


# ---------------------------------- main --------------------------------------

if __name__ == "__main__":
    key = jax.random.PRNGKey(0)
    kx, kp = jax.random.split(key)

    B, S, dim_in, dim_out = 2, 8, 32, 64   # (batch, seq, hidden) -> dim_out
    x = jax.random.normal(kx, (B, S, dim_in), dtype=jnp.float32)

    mod = GEGLUPallas(dim_in, dim_out, key=kp)

    out = mod(x)
    jax.block_until_ready(out)

    ref = reference_forward(mod, x.reshape(-1, dim_in)).reshape(B, S, dim_out)
    assert out.shape == (B, S, dim_out), out.shape
    err = float(jnp.max(jnp.abs(out.astype(jnp.float32) - ref.astype(jnp.float32))))
    assert err < 1e-2, err

    print("KERNEL_OK")
</pallas_src>

<mosaic_0001>
module attributes {stable_mosaic.version = 11 : i64} {
  func.func @_geglu_kernel_single(%arg0: i32, %arg1: i32, %arg2: i32, %arg3: memref<16x128xbf16, #tpu.memory_space<vmem>>, %arg4: memref<2x128x128xbf16, #tpu.memory_space<vmem>>, %arg5: memref<2x1x128xf32, #tpu.memory_space<vmem>>, %arg6: memref<16x128xf32, #tpu.memory_space<vmem>>) attributes {dimension_semantics = [#tpu.dimension_semantics<parallel>, #tpu.dimension_semantics<parallel>, #tpu.dimension_semantics<arbitrary>], iteration_bounds = array<i64: 1, 1, 1>, scalar_prefetch = 0 : i64, scratch_operands = 0 : i64, tpu.core_type = #tpu.core_type<tc>, window_params = [{transform_indices = @transform_0, window_bounds = array<i64: 16, 128>}, {transform_indices = @transform_1, window_bounds = array<i64: 2, 128, 128>}, {transform_indices = @transform_2, window_bounds = array<i64: 2, 1, 128>}, {transform_indices = @transform_3, window_bounds = array<i64: 16, 128>}]} {
    %c0 = arith.constant 0 : index
    %c0_0 = arith.constant 0 : index
    %0 = vector.load %arg3[%c0, %c0_0] : memref<16x128xbf16, #tpu.memory_space<vmem>>, vector<16x128xbf16>
    %c0_1 = arith.constant 0 : index
    %c0_2 = arith.constant 0 : index
    %c0_3 = arith.constant 0 : index
    %1 = vector.load %arg4[%c0_1, %c0_2, %c0_3] : memref<2x128x128xbf16, #tpu.memory_space<vmem>>, vector<1x128x128xbf16>
    %2 = vector.shape_cast %1 : vector<1x128x128xbf16> to vector<128x128xbf16>
    %cst = arith.constant dense<0.000000e+00> : vector<16x128xf32>
    %3 = tpu.matmul %0, %2, %cst {dimension_numbers = #tpu.dot_dimension_numbers<[1], [0], [0], [1], [0, 0, 1, 1], [], []>} : vector<16x128xbf16>, vector<128x128xbf16>, vector<16x128xf32> -> vector<16x128xf32>
    %c1 = arith.constant 1 : index
    %c0_4 = arith.constant 0 : index
    %c0_5 = arith.constant 0 : index
    %4 = vector.load %arg4[%c1, %c0_4, %c0_5] : memref<2x128x128xbf16, #tpu.memory_space<vmem>>, vector<1x128x128xbf16>
    %5 = vector.shape_cast %4 : vector<1x128x128xbf16> to vector<128x128xbf16>
    %cst_6 = arith.constant dense<0.000000e+00> : vector<16x128xf32>
    %6 = tpu.matmul %0, %5, %cst_6 {dimension_numbers = #tpu.dot_dimension_numbers<[1], [0], [0], [1], [0, 0, 1, 1], [], []>} : vector<16x128xbf16>, vector<128x128xbf16>, vector<16x128xf32> -> vector<16x128xf32>
    %c0_7 = arith.constant 0 : index
    %c0_8 = arith.constant 0 : index
    %c0_9 = arith.constant 0 : index
    %7 = vector.load %arg5[%c0_7, %c0_8, %c0_9] : memref<2x1x128xf32, #tpu.memory_space<vmem>>, vector<1x1x128xf32>
    %8 = vector.shape_cast %7 : vector<1x1x128xf32> to vector<1x128xf32>
    %9 = vector.broadcast %8 : vector<1x128xf32> to vector<16x128xf32>
    %10 = arith.addf %3, %9 : vector<16x128xf32>
    %c1_10 = arith.constant 1 : index
    %c0_11 = arith.constant 0 : index
    %c0_12 = arith.constant 0 : index
    %11 = vector.load %arg5[%c1_10, %c0_11, %c0_12] : memref<2x1x128xf32, #tpu.memory_space<vmem>>, vector<1x1x128xf32>
    %12 = vector.shape_cast %11 : vector<1x1x128xf32> to vector<1x128xf32>
    %13 = vector.broadcast %12 : vector<1x128xf32> to vector<16x128xf32>
    %14 = arith.addf %6, %13 : vector<16x128xf32>
    %cst_13 = arith.constant 5.000000e-01 : f32
    %15 = vector.broadcast %cst_13 : f32 to vector<16x128xf32>
    %16 = arith.mulf %15, %14 : vector<16x128xf32>
    %cst_14 = arith.constant 0.707106769 : f32
    %17 = vector.broadcast %cst_14 : f32 to vector<16x128xf32>
    %18 = arith.mulf %14, %17 : vector<16x128xf32>
    %cst_15 = arith.constant -3.8325069 : f32
    %cst_16 = arith.constant 3.8325069 : f32
    %19 = vector.broadcast %cst_15 : f32 to vector<16x128xf32>
    %20 = arith.maximumf %19, %18 : vector<16x128xf32>
    %21 = vector.broadcast %cst_16 : f32 to vector<16x128xf32>
    %22 = arith.minimumf %21, %20 : vector<16x128xf32>
    %23 = arith.mulf %22, %22 : vector<16x128xf32>
    %cst_17 = arith.constant 2.29050653E-4 : f32
    %24 = vector.broadcast %cst_17 : f32 to vector<16x128xf32>
    %25 = arith.mulf %24, %23 : vector<16x128xf32>
    %cst_18 = arith.constant 0.00340829091 : f32
    %26 = vector.broadcast %cst_18 : f32 to vector<16x128xf32>
    %27 = arith.addf %25, %26 : vector<16x128xf32>
    %28 = arith.mulf %27, %23 : vector<16x128xf32>
    %cst_19 = arith.constant 0.0509556942 : f32
    %29 = vector.broadcast %cst_19 : f32 to vector<16x128xf32>
    %30 = arith.addf %28, %29 : vector<16x128xf32>
    %31 = arith.mulf %30, %23 : vector<16x128xf32>
    %cst_20 = arith.constant 0.185208321 : f32
    %32 = vector.broadcast %cst_20 : f32 to vector<16x128xf32>
    %33 = arith.addf %31, %32 : vector<16x128xf32>
    %34 = arith.mulf %33, %23 : vector<16x128xf32>
    %cst_21 = arith.constant 1.12837911 : f32
    %35 = vector.broadcast %cst_21 : f32 to vector<16x128xf32>
    %36 = arith.addf %34, %35 : vector<16x128xf32>
    %cst_22 = arith.constant -1.17916031E-7 : f32
    %37 = vector.broadcast %cst_22 : f32 to vector<16x128xf32>
    %38 = arith.mulf %37, %23 : vector<16x128xf32>
    %cst_23 = arith.constant 2.35479656E-5 : f32
    %39 = vector.broadcast %cst_23 : f32 to vector<16x128xf32>
    %40 = arith.addf %38, %39 : vector<16x128xf32>
    %41 = arith.mulf %40, %23 : vector<16x128xf32>
    %cst_24 = arith.constant 0.00101796258 : f32
    %42 = vector.broadcast %cst_24 : f32 to vector<16x128xf32>
    %43 = arith.addf %41, %42 : vector<16x128xf32>
    %44 = arith.mulf %43, %23 : vector<16x128xf32>
    %cst_25 = arith.constant 0.0140704699 : f32
    %45 = vector.broadcast %cst_25 : f32 to vector<16x128xf32>
    %46 = arith.addf %44, %45 : vector<16x128xf32>
    %47 = arith.mulf %46, %23 : vector<16x128xf32>
    %cst_26 = arith.constant 0.110985048 : f32
    %48 = vector.broadcast %cst_26 : f32 to vector<16x128xf32>
    %49 = arith.addf %47, %48 : vector<16x128xf32>
    %50 = arith.mulf %49, %23 : vector<16x128xf32>
    %cst_27 = arith.constant 0.497469246 : f32
    %51 = vector.broadcast %cst_27 : f32 to vector<16x128xf32>
    %52 = arith.addf %50, %51 : vector<16x128xf32>
    %53 = arith.mulf %52, %23 : vector<16x128xf32>
    %cst_28 = arith.constant 1.000000e+00 : f32
    %54 = vector.broadcast %cst_28 : f32 to vector<16x128xf32>
    %55 = arith.addf %53, %54 : vector<16x128xf32>
    %56 = arith.mulf %22, %36 : vector<16x128xf32>
    %57 = tpu.reciprocal %55 : vector<16x128xf32> -> vector<16x128xf32>
    %58 = arith.mulf %56, %57 : vector<16x128xf32>
    %cst_29 = arith.constant 1.000000e+00 : f32
    %59 = vector.broadcast %cst_29 : f32 to vector<16x128xf32>
    %60 = arith.addf %59, %58 : vector<16x128xf32>
    %61 = arith.mulf %16, %60 : vector<16x128xf32>
    %62 = arith.mulf %10, %61 : vector<16x128xf32>
    %c0_30 = arith.constant 0 : index
    %c0_31 = arith.constant 0 : index
    %63 = vector.load %arg6[%c0_30, %c0_31] : memref<16x128xf32, #tpu.memory_space<vmem>>, vector<16x128xf32>
    tpu.vector_store %arg6[%c0_30, %c0_31], %62 {strides = array<i32>} : memref<16x128xf32, #tpu.memory_space<vmem>>, vector<16x128xf32>,
    return
  }
  func.func @transform_0(%arg0: i32, %arg1: i32, %arg2: i32) -> (i32, i32) {
    %c0_i32 = arith.constant 0 : i32
    return %arg0, %arg2 : i32, i32
  }
  func.func @transform_1(%arg0: i32, %arg1: i32, %arg2: i32) -> (i32, i32, i32) {
    %c0_i32 = arith.constant 0 : i32
    %c0_i32_0 = arith.constant 0 : i32
    return %c0_i32, %arg2, %arg1 : i32, i32, i32
  }
  func.func @transform_2(%arg0: i32, %arg1: i32, %arg2: i32) -> (i32, i32, i32) {
    %c0_i32 = arith.constant 0 : i32
    %c0_i32_0 = arith.constant 0 : i32
    %c0_i32_1 = arith.constant 0 : i32
    return %c0_i32, %c0_i32_0, %arg1 : i32, i32, i32
  }
  func.func @transform_3(%arg0: i32, %arg1: i32, %arg2: i32) -> (i32, i32) {
    %c0_i32 = arith.constant 0 : i32
    return %arg0, %arg1 : i32, i32
  }
}

</mosaic_0001>

<llo_original>
// kernel: tpu_custom_call.1
$region0: #{tpu_custom_call.1}
  #allocation0 [shape = 'u32[]', space=smem, size = 0x4, offset = 0x4, fixed_abs, tag = 'smem constant byte address 0x4 - core index']
  #allocation1 [shape = 'u32[72,128]{1,0:T(1,128)}', space=vmem, size = 0x9000, scoped, tag = 'internal scratch']
  %s0 = inlined_call_operand.hbm [shape: bf16[16,128], index: 0, kind: input, shape index: {}]
  %s1 = inlined_call_operand.hbm [shape: bf16[2,128,128], index: 1, kind: input, shape index: {}]
  %s2 = inlined_call_operand.hbm [shape: f32[2,1,128], index: 2, kind: input, shape index: {}]
  %s3 = inlined_call_operand.hbm [shape: f32[16,128], index: 3, kind: output, shape index: {}]
  %s4 = sld [smem:[#allocation0]]
  $region34: #{tpu_custom_call.1} parent=0
    _
  %s6 = ssub.s32 1, %s4
  %s7 = scalar_select 0, %s6, %s4
  $region1: #{tpu_custom_call.1} parent=0
    #allocation2 [shape = 'u8[4096]{0}', space=vmem, size = 0x1000, scoped, tag = 'input window, operand 0, single buffered']
    #allocation3 [shape = 's32[1]{0}', space=sflag, size = 0x4, scoped, tag = 'scoped memory for tpu_custom_call.1']
    #allocation4 [shape = 's32[1]{0}', space=sflag, size = 0x4, scoped, tag = 'scoped memory for tpu_custom_call.1']
    #allocation5 [shape = 'u8[65536]{0}', space=vmem, size = 0x10000, scoped, tag = 'input window, operand 1, single buffered']
    #allocation6 [shape = 's32[1]{0}', space=sflag, size = 0x4, scoped, tag = 'scoped memory for tpu_custom_call.1']
    #allocation7 [shape = 'u8[1024]{0}', space=vmem, size = 0x400, scoped, tag = 'input window, operand 2, single buffered']
    #allocation8 [shape = 'u8[8192]{0}', space=vmem, size = 0x2000, scoped, tag = 'output window, operand 0, single buffered']
    %8 = vsyncpa [#allocation3], 0
    %9 = vsyncpa [#allocation6], 0
    %10 = vsyncpa [#allocation4], 0
    // Predicated region
    $region2: #{tpu_custom_call.1} parent=1 // pred_check
      _
    $region3: #{tpu_custom_call.1} parent=1 // pred_check_branch
      %12 = sbr.rel (0) target = $region5
    $region4: #{tpu_custom_call.1} parent=1 // pred_region
      %14 = vsyncadd [#allocation3], 0
      %s15 = sshll.u32 %s0, 4
      %s16 = int_to_ptr.hbm [resolvable:$true] %s15
      %s17 = sshll.u32 [#allocation2], 4
      %s18 = int_to_ptr.vmem [resolvable:$true] %s17
      %23 = dma.hbm_to_vmem [thread:$0]  %s16, 128, %s18, [#allocation3], 64, 64, 4
    $region5: #{tpu_custom_call.1} parent=1 // pred_fallthru
      _
    // Predicated region
    $region6: #{tpu_custom_call.1} parent=1 // pred_check
      _
    $region7: #{tpu_custom_call.1} parent=1 // pred_check_branch
      %25 = sbr.rel (0) target = $region9
    $region8: #{tpu_custom_call.1} parent=1 // pred_region
      %27 = vsyncadd [#allocation6], 0
      %s28 = sshll.u32 %s1, 4
      %s29 = int_to_ptr.hbm [resolvable:$true] %s28
      %s30 = sshll.u32 [#allocation5], 4
      %s31 = int_to_ptr.vmem [resolvable:$true] %s30
      %36 = dma.hbm_to_vmem [thread:$0]  %s29, 2048, %s31, [#allocation6], 64, 64, 4
    $region9: #{tpu_custom_call.1} parent=1 // pred_fallthru
      _
    // Predicated region
    $region10: #{tpu_custom_call.1} parent=1 // pred_check
      _
    $region11: #{tpu_custom_call.1} parent=1 // pred_check_branch
      %38 = sbr.rel (0) target = $region13
    $region12: #{tpu_custom_call.1} parent=1 // pred_region
      %40 = vsyncadd [#allocation6], 0
      %s41 = sshll.u32 %s2, 4
      %s42 = int_to_ptr.hbm [resolvable:$true] %s41
      %s43 = sshll.u32 [#allocation7], 4
      %s44 = int_to_ptr.vmem [resolvable:$true] %s43
      %49 = dma.hbm_to_vmem [thread:$0]  %s42, 32, %s44, [#allocation6], 16, 16, 1
    $region13: #{tpu_custom_call.1} parent=1 // pred_fallthru
      _
    // Predicated region
    $region14: #{tpu_custom_call.1} parent=1 // pred_check
      _
    $region15: #{tpu_custom_call.1} parent=1 // pred_check_branch
      %51 = sbr.rel (0) target = $region17
    $region16: #{tpu_custom_call.1} parent=1 // pred_region
      %53 = dma.done [#allocation3], 128
    $region17: #{tpu_custom_call.1} parent=1 // pred_fallthru
      _
    // Predicated region
    $region18: #{tpu_custom_call.1} parent=1 // pred_check
      _
    $region19: #{tpu_custom_call.1} parent=1 // pred_check_branch
      %55 = sbr.rel (0) target = $region21
    $region20: #{tpu_custom_call.1} parent=1 // pred_region
      %57 = dma.done [#allocation6], 2048
    $region21: #{tpu_custom_call.1} parent=1 // pred_fallthru
      _
    // Predicated region
    $region22: #{tpu_custom_call.1} parent=1 // pred_check
      _
    $region23: #{tpu_custom_call.1} parent=1 // pred_check_branch
      %59 = sbr.rel (0) target = $region25
    $region24: #{tpu_custom_call.1} parent=1 // pred_region
      %61 = dma.done [#allocation6], 32
    $region25: #{tpu_custom_call.1} parent=1 // pred_fallthru
      _
    %v62 = vld [vmem:[#allocation2] sm:$0xf]
    %v63 = vld [vmem:[#allocation2 + $0x4] sm:$0xf]
    %v64 = vld [vmem:[#allocation5] sm:$0xf]
    %v65 = vld [vmem:[#allocation5 + $0x4] sm:$0xf]
    %v66 = vld [vmem:[#allocation5 + $0x8] sm:$0xf]
    %v67 = vld [vmem:[#allocation5 + $0xc] sm:$0xf]
    %v68 = vld [vmem:[#allocation5 + $0x10] sm:$0xf]
    %v69 = vld [vmem:[#allocation5 + $0x14] sm:$0xf]
    %v70 = vld [vmem:[#allocation5 + $0x18] sm:$0xf]
    %v71 = vld [vmem:[#allocation5 + $0x1c] sm:$0xf]
    %v72 = vld [vmem:[#allocation5 + $0x20] sm:$0xf]
    %v73 = vld [vmem:[#allocation5 + $0x24] sm:$0xf]
    %v74 = vld [vmem:[#allocation5 + $0x28] sm:$0xf]
    %v75 = vld [vmem:[#allocation5 + $0x2c] sm:$0xf]
    %v76 = vld [vmem:[#allocation5 + $0x30] sm:$0xf]
    %v77 = vld [vmem:[#allocation5 + $0x34] sm:$0xf]
    %v78 = vld [vmem:[#allocation5 + $0x38] sm:$0xf]
    %v79 = vld [vmem:[#allocation5 + $0x3c] sm:$0xf]
    %s80 = scalar_lea.vmem [#allocation5], 64
    %v81 = vld [vmem:[%s80] sm:$0xf]
    %v82 = vld [vmem:[%s80 + $0x4] sm:$0xf]
    %v83 = vld [vmem:[%s80 + $0x8] sm:$0xf]
    %v84 = vld [vmem:[%s80 + $0xc] sm:$0xf]
    %v85 = vld [vmem:[%s80 + $0x10] sm:$0xf]
    %v86 = vld [vmem:[%s80 + $0x14] sm:$0xf]
    %v87 = vld [vmem:[%s80 + $0x18] sm:$0xf]
    %v88 = vld [vmem:[%s80 + $0x1c] sm:$0xf]
    %v89 = vld [vmem:[%s80 + $0x20] sm:$0xf]
    %v90 = vld [vmem:[%s80 + $0x24] sm:$0xf]
    %v91 = vld [vmem:[%s80 + $0x28] sm:$0xf]
    %v92 = vld [vmem:[%s80 + $0x2c] sm:$0xf]
    %v93 = vld [vmem:[%s80 + $0x30] sm:$0xf]
    %v94 = vld [vmem:[%s80 + $0x34] sm:$0xf]
    %v95 = vld [vmem:[%s80 + $0x38] sm:$0xf]
    %v96 = vld [vmem:[%s80 + $0x3c] sm:$0xf]
    %v97 = vld [vmem:[#allocation7] sm:$0x1]
    %v99 = vperm.slane %v97, 0
    %v103 = vunpack.c.l.b16 %v62
    %v104 = vunpack.c.l.b16 %v63
    %v105 = vpack.c.b16 %v104, %v103
    %v123 = vunpack.c.l.b16 %v64
    %v124 = vunpack.c.l.b16 %v65
    %v125 = vunpack.c.l.b16 %v66
    %v126 = vunpack.c.l.b16 %v67
    %v127 = vunpack.c.l.b16 %v68
    %v128 = vunpack.c.l.b16 %v69
    %v129 = vunpack.c.l.b16 %v70
    %v130 = vunpack.c.l.b16 %v71
    %v131 = vunpack.c.l.b16 %v72
    %v132 = vunpack.c.l.b16 %v73
    %v133 = vunpack.c.l.b16 %v74
    %v134 = vunpack.c.l.b16 %v75
    %v135 = vunpack.c.l.b16 %v76
    %v136 = vunpack.c.l.b16 %v77
    %v137 = vunpack.c.l.b16 %v78
    %v138 = vunpack.c.l.b16 %v79
    %v139 = vpack.c.b16 %v124, %v123
    %v140 = vpack.c.b16 %v126, %v125
    %v141 = vpack.c.b16 %v128, %v127
    %v142 = vpack.c.b16 %v130, %v129
    %v143 = vpack.c.b16 %v132, %v131
    %v144 = vpack.c.b16 %v134, %v133
    %v145 = vpack.c.b16 %v136, %v135
    %v146 = vpack.c.b16 %v138, %v137
    %155 = vmatpush.bf16.msra.mxu0 %v146
    %156 = vmatpush.bf16.msra.mxu0 %v145
    %157 = vmatpush.bf16.msra.mxu0 %v144
    %158 = vmatpush.bf16.msra.mxu0 %v143
    %159 = vmatpush.bf16.msra.mxu0 %v142
    %160 = vmatpush.bf16.msra.mxu0 %v141
    %161 = vmatpush.bf16.msra.mxu0 %v140
    %162 = vmatpush.bf16.msra.mxu0 %v139
    %163 = vmatmul.bf16.gmra.mxu0 %v105
    %v164 = vpop.f32.mrf.mxu0
    %v165 = vadd.f32 %v99, %v164
    %v166 = vpop.f32.mrf.mxu0
    %v167 = vadd.f32 %v99, %v166
    %168 = vdwg.mxu0
    %s169 = scalar_lea.vmem [#allocation7], 1
    %v170 = vld [vmem:[%s169] sm:$0x1]
    %v172 = vperm.slane %v170, 0
    %v190 = vunpack.c.l.b16 %v81
    %v191 = vunpack.c.l.b16 %v82
    %v192 = vunpack.c.l.b16 %v83
    %v193 = vunpack.c.l.b16 %v84
    %v194 = vunpack.c.l.b16 %v85
    %v195 = vunpack.c.l.b16 %v86
    %v196 = vunpack.c.l.b16 %v87
    %v197 = vunpack.c.l.b16 %v88
    %v198 = vunpack.c.l.b16 %v89
    %v199 = vunpack.c.l.b16 %v90
    %v200 = vunpack.c.l.b16 %v91
    %v201 = vunpack.c.l.b16 %v92
    %v202 = vunpack.c.l.b16 %v93
    %v203 = vunpack.c.l.b16 %v94
    %v204 = vunpack.c.l.b16 %v95
    %v205 = vunpack.c.l.b16 %v96
    %v206 = vpack.c.b16 %v191, %v190
    %v207 = vpack.c.b16 %v193, %v192
    %v208 = vpack.c.b16 %v195, %v194
    %v209 = vpack.c.b16 %v197, %v196
    %v210 = vpack.c.b16 %v199, %v198
    %v211 = vpack.c.b16 %v201, %v200
    %v212 = vpack.c.b16 %v203, %v202
    %v213 = vpack.c.b16 %v205, %v204
    %222 = vmatpush.bf16.msra.mxu0 %v213
    %223 = vmatpush.bf16.msra.mxu0 %v212
    %224 = vmatpush.bf16.msra.mxu0 %v211
    %225 = vmatpush.bf16.msra.mxu0 %v210
    %226 = vmatpush.bf16.msra.mxu0 %v209
    %227 = vmatpush.bf16.msra.mxu0 %v208
    %228 = vmatpush.bf16.msra.mxu0 %v207
    %229 = vmatpush.bf16.msra.mxu0 %v206
    %230 = vmatmul.bf16.gmra.mxu0 %v105
    %v231 = vpop.f32.mrf.mxu0
    %v232 = vadd.f32 %v172, %v231
    %v233 = vpop.f32.mrf.mxu0
    %v234 = vadd.f32 %v172, %v233
    %235 = vdwg.mxu0
    %v236 = vmul.f32 %v232, 0.5
    %v237 = vmul.f32 %v234, 0.5
    %v238 = vmul.f32 %v232, 0.70710677
    %v239 = vmul.f32 %v234, 0.70710677
    %v240 = vmax.f32 %v238, -3.832507
    %v241 = vmax.f32 %v239, -3.832507
    %v242 = vmin.f32 %v240, 3.832507
    %v243 = vmin.f32 %v241, 3.832507
    %v244 = vmul.f32 %v242, %v242
    %v245 = vmul.f32 %v243, %v243
    %v246 = vmul.f32 %v244, 0.00022905065
    %v247 = vmul.f32 %v245, 0.00022905065
    %v248 = vadd.f32 %v246, 0.003408291
    %v249 = vadd.f32 %v247, 0.003408291
    %v250 = vmul.f32 %v248, %v244
    %v251 = vmul.f32 %v249, %v245
    %v252 = vadd.f32 %v250, 0.050955694
    %v253 = vadd.f32 %v251, 0.050955694
    %v254 = vmul.f32 %v252, %v244
    %v255 = vmul.f32 %v253, %v245
    %v256 = vadd.f32 %v254, 0.18520832
    %v257 = vadd.f32 %v255, 0.18520832
    %v258 = vmul.f32 %v256, %v244
    %v259 = vmul.f32 %v257, %v245
    %v260 = vadd.f32 %v258, 1.1283791
    %v261 = vadd.f32 %v259, 1.1283791
    %v262 = vmul.f32 %v244, -1.1791603e-07
    %v263 = vmul.f32 %v245, -1.1791603e-07
    %v264 = vadd.f32 %v262, 2.3547966e-05
    %v265 = vadd.f32 %v263, 2.3547966e-05
    %v266 = vmul.f32 %v264, %v244
    %v267 = vmul.f32 %v265, %v245
    %v268 = vadd.f32 %v266, 0.0010179626
    %v269 = vadd.f32 %v267, 0.0010179626
    %v270 = vmul.f32 %v268, %v244
    %v271 = vmul.f32 %v269, %v245
    %v272 = vadd.f32 %v270, 0.01407047
    %v273 = vadd.f32 %v271, 0.01407047
    %v274 = vmul.f32 %v272, %v244
    %v275 = vmul.f32 %v273, %v245
    %v276 = vadd.f32 %v274, 0.11098505
    %v277 = vadd.f32 %v275, 0.11098505
    %v278 = vmul.f32 %v276, %v244
    %v279 = vmul.f32 %v277, %v245
    %v280 = vadd.f32 %v278, 0.49746925
    %v281 = vadd.f32 %v279, 0.49746925
    %v282 = vmul.f32 %v280, %v244
    %v283 = vmul.f32 %v281, %v245
    %v284 = vadd.f32 %v282, 1.0
    %v285 = vadd.f32 %v283, 1.0
    %v286 = vmul.f32 %v242, %v260
    %v287 = vmul.f32 %v243, %v261
    %v288 = vrcp.pop %v284
    %v289 = vmul.f32 %v284, %v288
    %v290 = vsub.f32 1.0, %v289
    %v291 = vmul.f32 %v288, %v290
    %v292 = vadd.f32 %v288, %v291
    %vm293 = vweird.f32 %v284
    %vm294 = vweird.f32 %v288
    %vm295 = vmor %vm293, %vm294
    %v296 = vsel %vm295, %v288, %v292
    %v297 = vand.u32 2147483647, %v284
    %vm298 = vcmp.eq.f32.partialorder %v297, 8.507059e+37
    %v299 = vand.u32 %v284, 2147483648
    %v300 = vor.u32 1.1754944e-38, %v299
    %v301 = vsel %vm298, %v300, %v296
    %v302 = vrcp.pop %v285
    %v303 = vmul.f32 %v285, %v302
    %v304 = vsub.f32 1.0, %v303
    %v305 = vmul.f32 %v302, %v304
    %v306 = vadd.f32 %v302, %v305
    %vm307 = vweird.f32 %v285
    %vm308 = vweird.f32 %v302
    %vm309 = vmor %vm307, %vm308
    %v310 = vsel %vm309, %v302, %v306
    %v311 = vand.u32 2147483647, %v285
    %vm312 = vcmp.eq.f32.partialorder %v311, 8.507059e+37
    %v313 = vand.u32 %v285, 2147483648
    %v314 = vor.u32 1.1754944e-38, %v313
    %v315 = vsel %vm312, %v314, %v310
    %v316 = vmul.f32 %v286, %v301
    %v317 = vmul.f32 %v287, %v315
    %v318 = vadd.f32 %v316, 1.0
    %v319 = vadd.f32 %v317, 1.0
    %v320 = vmul.f32 %v236, %v318
    %v321 = vmul.f32 %v237, %v319
    %v322 = vmul.f32 %v165, %v320
    %v323 = vmul.f32 %v167, %v321
    %324 = vst [vmem:[#allocation8] sm:$0xff] %v322
    %325 = vst [vmem:[#allocation8 + $0x8] sm:$0xff] %v323
    // Predicated region
    $region26: #{tpu_custom_call.1} parent=1 // pred_check
      _
    $region27: #{tpu_custom_call.1} parent=1 // pred_check_branch
      %327 = sbr.rel (0) target = $region29
    $region28: #{tpu_custom_call.1} parent=1 // pred_region
      %329 = vsyncadd [#allocation4], 0
      %s330 = sshll.u32 [#allocation8], 4
      %s331 = int_to_ptr.vmem [resolvable:$true] %s330
      %s332 = sshll.u32 %s3, 4
      %s333 = int_to_ptr.hbm [resolvable:$true] %s332
      %338 = dma.vmem_to_hbm [thread:$0]  %s331, 256, %s333, [#allocation4], 128, 128, 8
    $region29: #{tpu_custom_call.1} parent=1 // pred_fallthru
      _
    // Predicated region
    $region30: #{tpu_custom_call.1} parent=1 // pred_check
      _
    $region31: #{tpu_custom_call.1} parent=1 // pred_check_branch
      %340 = sbr.rel (0) target = $region33
    $region32: #{tpu_custom_call.1} parent=1 // pred_region
      %342 = dma.done [#allocation4], 256
    $region33: #{tpu_custom_call.1} parent=1 // pred_fallthru
      _
    %343 = vsyncpa [#allocation3], 1
    %344 = vsyncpa [#allocation6], 1
    %345 = vsyncpa [#allocation4], 1

</llo_original>
